<compile_context>
chip_gen: v7x
topology: tpu7x:2x2x1
jax: 0.10.0
libtpu: 0.0.40
codegen_flags: <defaults>
</compile_context>

<pallas_src>
import jax
import jax.numpy as jnp
from jax.experimental import pallas as pl
from jax.experimental.pallas import tpu as pltpu


def _ffn_kernel(x_ref, w1_ref, b1_ref, w2_ref, b2_ref, o_ref):
    # fc1 (bf16 MXU matmul, f32 accumulation) + bias + ReLU
    h = jnp.dot(x_ref[...], w1_ref[...], preferred_element_type=jnp.float32)
    h = jnp.maximum(h + b1_ref[...], 0.0)                 # (tm, H) + (1, H) broadcast, VPU ReLU
    # fc2 (bf16 MXU matmul, f32 accumulation) + bias
    y = jnp.dot(h.astype(jnp.bfloat16), w2_ref[...], preferred_element_type=jnp.float32)
    o_ref[...] = (y + b2_ref[...]).astype(o_ref.dtype)    # full-128-lane store (O padded)


def _pick_block_batch(B):
    """Batch tile: multiple of 16 (bf16 sublane packing), 128/256 at real sizes,
    and >= 2 grid steps whenever B allows (v7x has 2 TensorCores)."""
    for tm in (256, 128, 64, 32, 16):
        if B >= 2 * tm:
            return tm
    return 16


def _vmem_limit_bytes(tm, E, H, O_pad):
    bf16, f32 = 2, 4
    weights = E * H * bf16 + H * O_pad * bf16 + H * f32 + O_pad * f32   # single-buffered residents
    acts = 2 * tm * E * bf16 + 2 * tm * O_pad * f32                     # double-buffered x / out tiles
    hidden = tm * H * (f32 + bf16)                                      # fc1 activation (f32 acc + bf16 cast)
    est = weights + acts + hidden
    # 2x headroom for compiler temporaries; stay under v7x's 64 MiB physical VMEM.
    return int(min(max(2 * est, 8 * 1024 * 1024), 60 * 1024 * 1024))


def _resident_spec(block_shape):
    """Single-buffered BlockSpec for grid-invariant operands (weights / biases)."""
    index_map = lambda i: (0,) * len(block_shape)
    try:
        return pl.BlockSpec(block_shape, index_map, pipeline_mode=pl.Buffered(1))
    except TypeError:
        # Older jax without pipeline_mode support: fall back to default buffering.
        return pl.BlockSpec(block_shape, index_map)


def b1e_seq_pred_ffn(x, w1, b1, w2, b2, *, block_batch=None):
    """Fused relu(x @ w1 + b1) @ w2 + b2.

    x: (B, E); w1: (E, H); b1: (H,); w2: (H, O); b2: (O,)  -> (B, O) f32.
    Matmuls run in bf16 on the MXU with f32 accumulation.
    """
    B, E = x.shape
    H = w1.shape[1]
    O = w2.shape[1]

    if block_batch is None:
        block_batch = _pick_block_batch(B)

    B_pad = ((B + block_batch - 1) // block_batch) * block_batch
    O_pad = max(128, ((O + 127) // 128) * 128)   # lane-dense output -> unmasked stores

    # Cast / pad operands in the wrapper (layout plumbing, not compute).
    x_bf = x.astype(jnp.bfloat16)
    if B_pad != B:
        x_bf = jnp.pad(x_bf, ((0, B_pad - B), (0, 0)))
    w1_bf = w1.astype(jnp.bfloat16)
    w2_bf = jnp.pad(w2.astype(jnp.bfloat16), ((0, 0), (0, O_pad - O)))
    b1_2d = b1.reshape(1, H).astype(jnp.float32)
    b2_2d = jnp.pad(b2.reshape(1, O).astype(jnp.float32), ((0, 0), (0, O_pad - O)))

    grid = (B_pad // block_batch,)

    out = pl.pallas_call(
        _ffn_kernel,
        out_shape=jax.ShapeDtypeStruct((B_pad, O_pad), jnp.float32),
        grid_spec=pltpu.PrefetchScalarGridSpec(
            num_scalar_prefetch=0,
            grid=grid,
            in_specs=[
                pl.BlockSpec((block_batch, E), lambda i: (i, 0)),  # x tile (double-buffered)
                _resident_spec((E, H)),                            # w1 (resident, single-buffered)
                _resident_spec((1, H)),                            # b1
                _resident_spec((H, O_pad)),                        # w2
                _resident_spec((1, O_pad)),                        # b2
            ],
            out_specs=pl.BlockSpec((block_batch, O_pad), lambda i: (i, 0)),
        ),
        compiler_params=pltpu.CompilerParams(
            dimension_semantics=("parallel",),
            vmem_limit_bytes=_vmem_limit_bytes(block_batch, E, H, O_pad),
        ),
    )(x_bf, w1_bf, b1_2d, w2_bf, b2_2d)

    return out[:B, :O]


if __name__ == "__main__":
    # Small shapes consistent with the module (glob_n scaled down from 2048).
    batch = 8
    embedding_dim = 256
    hidden = 256        # stands in for glob_n = 2048
    output_dim = 16

    key = jax.random.PRNGKey(0)
    k_x, k_w1, k_b1, k_w2, k_b2 = jax.random.split(key, 5)

    # Input shaped like the PyTorch usage: (B, 1, E); forward does .squeeze().
    x_in = jax.random.normal(k_x, (batch, 1, embedding_dim), dtype=jnp.float32)

    # Deterministic parameter init mimicking nn.Linear's U(-1/sqrt(fan_in), 1/sqrt(fan_in)).
    bound1 = 1.0 / (embedding_dim ** 0.5)
    bound2 = 1.0 / (hidden ** 0.5)
    # PyTorch weights are (out, in); store transposed (in, out) for the kernel.
    w1 = jax.random.uniform(k_w1, (embedding_dim, hidden), jnp.float32, -bound1, bound1)
    b1 = jax.random.uniform(k_b1, (hidden,), jnp.float32, -bound1, bound1)
    w2 = jax.random.uniform(k_w2, (hidden, output_dim), jnp.float32, -bound2, bound2)
    b2 = jax.random.uniform(k_b2, (output_dim,), jnp.float32, -bound2, bound2)

    # Glue: squeeze the size-1 seq axis (axis=1), matching x.squeeze() without
    # accidentally dropping the batch axis when batch == 1.
    x = jnp.squeeze(x_in, axis=1)

    out = b1e_seq_pred_ffn(x, w1, b1, w2, b2)
    out = jax.block_until_ready(out)
    assert out.shape == (batch, output_dim)

    # Mixed-precision reference matching the kernel's bf16-matmul / f32-accumulate numerics.
    x_bf, w1_bf, w2_bf = (a.astype(jnp.bfloat16) for a in (x, w1, w2))
    h_ref = jnp.maximum(jnp.dot(x_bf, w1_bf, preferred_element_type=jnp.float32) + b1, 0.0)
    ref_mp = jnp.dot(h_ref.astype(jnp.bfloat16), w2_bf, preferred_element_type=jnp.float32) + b2
    assert jnp.allclose(out, ref_mp, rtol=1e-2, atol=1e-2)

    # Full-f32 reference (module semantics), looser tolerance for the bf16 MXU path.
    ref_f32 = jnp.maximum(x @ w1 + b1, 0.0) @ w2 + b2
    assert jnp.allclose(out, ref_f32, rtol=5e-2, atol=5e-2)

    print("KERNEL_OK")
</pallas_src>

<mosaic_0001>
module attributes {stable_mosaic.version = 11 : i64} {
  func.func @_ffn_kernel(%arg0: i32, %arg1: memref<16x256xbf16, #tpu.memory_space<vmem>>, %arg2: memref<256x256xbf16, #tpu.memory_space<vmem>>, %arg3: memref<1x256xf32, #tpu.memory_space<vmem>>, %arg4: memref<256x128xbf16, #tpu.memory_space<vmem>>, %arg5: memref<1x128xf32, #tpu.memory_space<vmem>>, %arg6: memref<16x128xf32, #tpu.memory_space<vmem>>) attributes {dimension_semantics = [#tpu.dimension_semantics<parallel>], iteration_bounds = array<i64: 1>, scalar_prefetch = 0 : i64, scratch_operands = 0 : i64, tpu.core_type = #tpu.core_type<tc>, window_params = [{transform_indices = @transform_0, window_bounds = array<i64: 16, 256>}, {pipeline_mode = #tpu.pipeline_mode<synchronous>, transform_indices = @transform_1, window_bounds = array<i64: 256, 256>}, {pipeline_mode = #tpu.pipeline_mode<synchronous>, transform_indices = @transform_2, window_bounds = array<i64: 1, 256>}, {pipeline_mode = #tpu.pipeline_mode<synchronous>, transform_indices = @transform_3, window_bounds = array<i64: 256, 128>}, {pipeline_mode = #tpu.pipeline_mode<synchronous>, transform_indices = @transform_4, window_bounds = array<i64: 1, 128>}, {transform_indices = @transform_5, window_bounds = array<i64: 16, 128>}]} {
    %c0 = arith.constant 0 : index
    %c0_0 = arith.constant 0 : index
    %0 = vector.load %arg1[%c0, %c0_0] : memref<16x256xbf16, #tpu.memory_space<vmem>>, vector<16x256xbf16>
    %c0_1 = arith.constant 0 : index
    %c0_2 = arith.constant 0 : index
    %1 = vector.load %arg2[%c0_1, %c0_2] : memref<256x256xbf16, #tpu.memory_space<vmem>>, vector<256x256xbf16>
    %cst = arith.constant dense<0.000000e+00> : vector<16x256xf32>
    %2 = tpu.matmul %0, %1, %cst {dimension_numbers = #tpu.dot_dimension_numbers<[1], [0], [0], [1], [0, 0, 1, 1], [], []>} : vector<16x256xbf16>, vector<256x256xbf16>, vector<16x256xf32> -> vector<16x256xf32>
    %c0_3 = arith.constant 0 : index
    %c0_4 = arith.constant 0 : index
    %3 = vector.load %arg3[%c0_3, %c0_4] : memref<1x256xf32, #tpu.memory_space<vmem>>, vector<1x256xf32>
    %4 = vector.broadcast %3 : vector<1x256xf32> to vector<16x256xf32>
    %5 = arith.addf %2, %4 : vector<16x256xf32>
    %cst_5 = arith.constant 0.000000e+00 : f32
    %6 = vector.broadcast %cst_5 : f32 to vector<16x256xf32>
    %7 = arith.maximumf %5, %6 : vector<16x256xf32>
    %8 = arith.truncf %7 : vector<16x256xf32> to vector<16x256xbf16>
    %c0_6 = arith.constant 0 : index
    %c0_7 = arith.constant 0 : index
    %9 = vector.load %arg4[%c0_6, %c0_7] : memref<256x128xbf16, #tpu.memory_space<vmem>>, vector<256x128xbf16>
    %cst_8 = arith.constant dense<0.000000e+00> : vector<16x128xf32>
    %10 = tpu.matmul %8, %9, %cst_8 {dimension_numbers = #tpu.dot_dimension_numbers<[1], [0], [0], [1], [0, 0, 1, 1], [], []>} : vector<16x256xbf16>, vector<256x128xbf16>, vector<16x128xf32> -> vector<16x128xf32>
    %c0_9 = arith.constant 0 : index
    %c0_10 = arith.constant 0 : index
    %11 = vector.load %arg5[%c0_9, %c0_10] : memref<1x128xf32, #tpu.memory_space<vmem>>, vector<1x128xf32>
    %12 = vector.broadcast %11 : vector<1x128xf32> to vector<16x128xf32>
    %13 = arith.addf %10, %12 : vector<16x128xf32>
    %c0_11 = arith.constant 0 : index
    %c0_12 = arith.constant 0 : index
    %14 = vector.load %arg6[%c0_11, %c0_12] : memref<16x128xf32, #tpu.memory_space<vmem>>, vector<16x128xf32>
    tpu.vector_store %arg6[%c0_11, %c0_12], %13 {strides = array<i32>} : memref<16x128xf32, #tpu.memory_space<vmem>>, vector<16x128xf32>,
    return
  }
  func.func @transform_0(%arg0: i32) -> (i32, i32) {
    %c0_i32 = arith.constant 0 : i32
    %c0_i32_0 = arith.constant 0 : i32
    return %arg0, %c0_i32 : i32, i32
  }
  func.func @transform_1(%arg0: i32) -> (i32, i32) {
    %c0_i32 = arith.constant 0 : i32
    %c0_i32_0 = arith.constant 0 : i32
    %c0_i32_1 = arith.constant 0 : i32
    return %c0_i32, %c0_i32_0 : i32, i32
  }
  func.func @transform_2(%arg0: i32) -> (i32, i32) {
    %c0_i32 = arith.constant 0 : i32
    %c0_i32_0 = arith.constant 0 : i32
    %c0_i32_1 = arith.constant 0 : i32
    return %c0_i32, %c0_i32_0 : i32, i32
  }
  func.func @transform_3(%arg0: i32) -> (i32, i32) {
    %c0_i32 = arith.constant 0 : i32
    %c0_i32_0 = arith.constant 0 : i32
    %c0_i32_1 = arith.constant 0 : i32
    return %c0_i32, %c0_i32_0 : i32, i32
  }
  func.func @transform_4(%arg0: i32) -> (i32, i32) {
    %c0_i32 = arith.constant 0 : i32
    %c0_i32_0 = arith.constant 0 : i32
    %c0_i32_1 = arith.constant 0 : i32
    return %c0_i32, %c0_i32_0 : i32, i32
  }
  func.func @transform_5(%arg0: i32) -> (i32, i32) {
    %c0_i32 = arith.constant 0 : i32
    %c0_i32_0 = arith.constant 0 : i32
    return %arg0, %c0_i32 : i32, i32
  }
}

</mosaic_0001>

<llo_original>
// kernel: tpu_custom_call.1
$region0: #{tpu_custom_call.1}
  #allocation0 [shape = 'u32[]', space=smem, size = 0x4, offset = 0x4, fixed_abs, tag = 'smem constant byte address 0x4 - core index']
  #allocation1 [shape = 'u32[144,128]{1,0:T(1,128)}', space=vmem, size = 0x12000, scoped, tag = 'internal scratch']
  %s0 = inlined_call_operand.hbm [shape: bf16[16,256], index: 0, kind: input, shape index: {}]
  %s1 = inlined_call_operand.hbm [shape: bf16[256,256], index: 1, kind: input, shape index: {}]
  %s2 = inlined_call_operand.vmem [shape: f32[1,256], index: 2, kind: input, shape index: {}]
  %s3 = inlined_call_operand.hbm [shape: bf16[256,128], index: 3, kind: input, shape index: {}]
  %s4 = inlined_call_operand.vmem [shape: f32[1,128], index: 4, kind: input, shape index: {}]
  %s5 = inlined_call_operand.hbm [shape: f32[16,128], index: 5, kind: output, shape index: {}]
  %s6 = sld [smem:[#allocation0]]
  $region42: #{tpu_custom_call.1} parent=0
    _
  %s8 = ssub.s32 1, %s6
  %s9 = scalar_select 0, %s8, %s6
  $region1: #{tpu_custom_call.1} parent=0
    #allocation2 [shape = 'u8[8192]{0}', space=vmem, size = 0x2000, scoped, tag = 'input window, operand 0, single buffered']
    #allocation3 [shape = 's32[1]{0}', space=sflag, size = 0x4, scoped, tag = 'scoped memory for tpu_custom_call.1']
    #allocation4 [shape = 's32[1]{0}', space=sflag, size = 0x4, scoped, tag = 'scoped memory for tpu_custom_call.1']
    #allocation5 [shape = 'u8[131072]{0}', space=vmem, size = 0x20000, scoped, tag = 'input window, operand 1, single buffered']
    #allocation6 [shape = 's32[1]{0}', space=sflag, size = 0x4, scoped, tag = 'scoped memory for tpu_custom_call.1']
    #allocation7 [shape = 'u8[65536]{0}', space=vmem, size = 0x10000, scoped, tag = 'input window, operand 3, single buffered']
    #allocation8 [shape = 'u8[8192]{0}', space=vmem, size = 0x2000, scoped, tag = 'output window, operand 0, single buffered']
    %10 = vsyncpa [#allocation3], 0
    %11 = vsyncpa [#allocation6], 0
    %12 = vsyncpa [#allocation4], 0
    // Predicated region
    $region2: #{tpu_custom_call.1} parent=1 // pred_check
      _
    $region3: #{tpu_custom_call.1} parent=1 // pred_check_branch
      %14 = sbr.rel (0) target = $region5
    $region4: #{tpu_custom_call.1} parent=1 // pred_region
      %s16 = ssub.s32 256, 256
      %17 = vsyncadd [#allocation3], %s16
      %s18 = sshll.u32 [#allocation2], 4
      %s19 = int_to_ptr.vmem [resolvable:$true] %s18
      %24 = dma.hbm_to_vmem [thread:$0]  %s0, 256, %s19, [#allocation3], 128, 128, 8
    $region5: #{tpu_custom_call.1} parent=1 // pred_fallthru
      _
    // Predicated region
    $region6: #{tpu_custom_call.1} parent=1 // pred_check
      _
    $region7: #{tpu_custom_call.1} parent=1 // pred_check_branch
      %26 = sbr.rel (0) target = $region9
    $region8: #{tpu_custom_call.1} parent=1 // pred_region
      %s28 = ssub.s32 4096, 4096
      %29 = vsyncadd [#allocation6], %s28
      %s30 = sshll.u32 [#allocation5], 4
      %s31 = int_to_ptr.vmem [resolvable:$true] %s30
      %36 = dma.hbm_to_vmem [thread:$0]  %s1, 4096, %s31, [#allocation6], 128, 128, 8
    $region9: #{tpu_custom_call.1} parent=1 // pred_fallthru
      _
    // Predicated region
    $region10: #{tpu_custom_call.1} parent=1 // pred_check
      _
    $region11: #{tpu_custom_call.1} parent=1 // pred_check_branch
      %38 = sbr.rel (0) target = $region13
    $region12: #{tpu_custom_call.1} parent=1 // pred_region
      _
    $region13: #{tpu_custom_call.1} parent=1 // pred_fallthru
      _
    // Predicated region
    $region14: #{tpu_custom_call.1} parent=1 // pred_check
      _
    $region15: #{tpu_custom_call.1} parent=1 // pred_check_branch
      %40 = sbr.rel (0) target = $region17
    $region16: #{tpu_custom_call.1} parent=1 // pred_region
      %s42 = ssub.s32 2048, 2048
      %43 = vsyncadd [#allocation6], %s42
      %s44 = sshll.u32 [#allocation7], 4
      %s45 = int_to_ptr.vmem [resolvable:$true] %s44
      %50 = dma.hbm_to_vmem [thread:$0]  %s3, 2048, %s45, [#allocation6], 64, 64, 4
    $region17: #{tpu_custom_call.1} parent=1 // pred_fallthru
      _
    // Predicated region
    $region18: #{tpu_custom_call.1} parent=1 // pred_check
      _
    $region19: #{tpu_custom_call.1} parent=1 // pred_check_branch
      %52 = sbr.rel (0) target = $region21
    $region20: #{tpu_custom_call.1} parent=1 // pred_region
      _
    $region21: #{tpu_custom_call.1} parent=1 // pred_fallthru
      _
    // Predicated region
    $region22: #{tpu_custom_call.1} parent=1 // pred_check
      _
    $region23: #{tpu_custom_call.1} parent=1 // pred_check_branch
      %54 = sbr.rel (0) target = $region25
    $region24: #{tpu_custom_call.1} parent=1 // pred_region
      %55 = dma.done [#allocation3], 256
    $region25: #{tpu_custom_call.1} parent=1 // pred_fallthru
      _
    // Predicated region
    $region26: #{tpu_custom_call.1} parent=1 // pred_check
      _
    $region27: #{tpu_custom_call.1} parent=1 // pred_check_branch
      %57 = sbr.rel (0) target = $region29
    $region28: #{tpu_custom_call.1} parent=1 // pred_region
      %58 = dma.done [#allocation6], 4096
    $region29: #{tpu_custom_call.1} parent=1 // pred_fallthru
      _
    // Predicated region
    $region30: #{tpu_custom_call.1} parent=1 // pred_check
      _
    $region31: #{tpu_custom_call.1} parent=1 // pred_check_branch
      %60 = sbr.rel (0) target = $region33
    $region32: #{tpu_custom_call.1} parent=1 // pred_region
      %61 = dma.done [#allocation6], 2048
    $region33: #{tpu_custom_call.1} parent=1 // pred_fallthru
      _
    %v63 = vld [vmem:[#allocation2] sm:$0xff]
    %v64 = vld [vmem:[#allocation2 + $0x8] sm:$0xff]
    %v65 = vld [vmem:[#allocation5] sm:$0xff]
    %v66 = vld [vmem:[#allocation5 + $0x8] sm:$0xff]
    %v67 = vld [vmem:[#allocation5 + $0x10] sm:$0xff]
    %v68 = vld [vmem:[#allocation5 + $0x18] sm:$0xff]
    %v69 = vld [vmem:[#allocation5 + $0x20] sm:$0xff]
    %v70 = vld [vmem:[#allocation5 + $0x28] sm:$0xff]
    %v71 = vld [vmem:[#allocation5 + $0x30] sm:$0xff]
    %v72 = vld [vmem:[#allocation5 + $0x38] sm:$0xff]
    %v73 = vld [vmem:[#allocation5 + $0x40] sm:$0xff]
    %v74 = vld [vmem:[#allocation5 + $0x48] sm:$0xff]
    %v75 = vld [vmem:[#allocation5 + $0x50] sm:$0xff]
    %v76 = vld [vmem:[#allocation5 + $0x58] sm:$0xff]
    %v77 = vld [vmem:[#allocation5 + $0x60] sm:$0xff]
    %v78 = vld [vmem:[#allocation5 + $0x68] sm:$0xff]
    %v79 = vld [vmem:[#allocation5 + $0x70] sm:$0xff]
    %v80 = vld [vmem:[#allocation5 + $0x78] sm:$0xff]
    %v81 = vld [vmem:[#allocation5 + $0x80] sm:$0xff]
    %v82 = vld [vmem:[#allocation5 + $0x88] sm:$0xff]
    %v83 = vld [vmem:[#allocation5 + $0x90] sm:$0xff]
    %v84 = vld [vmem:[#allocation5 + $0x98] sm:$0xff]
    %v85 = vld [vmem:[#allocation5 + $0xa0] sm:$0xff]
    %v86 = vld [vmem:[#allocation5 + $0xa8] sm:$0xff]
    %v87 = vld [vmem:[#allocation5 + $0xb0] sm:$0xff]
    %v88 = vld [vmem:[#allocation5 + $0xb8] sm:$0xff]
    %v89 = vld [vmem:[#allocation5 + $0xc0] sm:$0xff]
    %v90 = vld [vmem:[#allocation5 + $0xc8] sm:$0xff]
    %v91 = vld [vmem:[#allocation5 + $0xd0] sm:$0xff]
    %v92 = vld [vmem:[#allocation5 + $0xd8] sm:$0xff]
    %v93 = vld [vmem:[#allocation5 + $0xe0] sm:$0xff]
    %v94 = vld [vmem:[#allocation5 + $0xe8] sm:$0xff]
    %v95 = vld [vmem:[#allocation5 + $0xf0] sm:$0xff]
    %v96 = vld [vmem:[#allocation5 + $0xf8] sm:$0xff]
    %v97 = vld [vmem:[%s2] sm:$0x3]
    %v99 = vlaneseq
    %v100 = vshrl.u32 %v99, 7
    %v101 = vsub.s32 0, %v100
    %v102 = vrot.slane %v97, %v101
    %v103 = vlaneseq
    %v104 = vshrl.u32 %v103, 7
    %v105 = vsub.s32 1, %v104
    %v106 = vrot.slane %v97, %v105
    %v111 = vunpack.c.l.b16 %v63
    %v112 = vunpack.c.h.b16 %v63
    %v113 = vunpack.c.l.b16 %v64
    %v114 = vunpack.c.h.b16 %v64
    %v115 = vpack.c.b16 %v113, %v111
    %v116 = vpack.c.b16 %v114, %v112
    %v151 = vunpack.c.l.b16 %v65
    %v152 = vunpack.c.h.b16 %v65
    %v153 = vunpack.c.l.b16 %v66
    %v154 = vunpack.c.h.b16 %v66
    %v155 = vunpack.c.l.b16 %v67
    %v156 = vunpack.c.h.b16 %v67
    %v157 = vunpack.c.l.b16 %v68
    %v158 = vunpack.c.h.b16 %v68
    %v159 = vunpack.c.l.b16 %v69
    %v160 = vunpack.c.h.b16 %v69
    %v161 = vunpack.c.l.b16 %v70
    %v162 = vunpack.c.h.b16 %v70
    %v163 = vunpack.c.l.b16 %v71
    %v164 = vunpack.c.h.b16 %v71
    %v165 = vunpack.c.l.b16 %v72
    %v166 = vunpack.c.h.b16 %v72
    %v167 = vunpack.c.l.b16 %v73
    %v168 = vunpack.c.h.b16 %v73
    %v169 = vunpack.c.l.b16 %v74
    %v170 = vunpack.c.h.b16 %v74
    %v171 = vunpack.c.l.b16 %v75
    %v172 = vunpack.c.h.b16 %v75
    %v173 = vunpack.c.l.b16 %v76
    %v174 = vunpack.c.h.b16 %v76
    %v175 = vunpack.c.l.b16 %v77
    %v176 = vunpack.c.h.b16 %v77
    %v177 = vunpack.c.l.b16 %v78
    %v178 = vunpack.c.h.b16 %v78
    %v179 = vunpack.c.l.b16 %v79
    %v180 = vunpack.c.h.b16 %v79
    %v181 = vunpack.c.l.b16 %v80
    %v182 = vunpack.c.h.b16 %v80
    %v183 = vunpack.c.l.b16 %v81
    %v184 = vunpack.c.h.b16 %v81
    %v185 = vunpack.c.l.b16 %v82
    %v186 = vunpack.c.h.b16 %v82
    %v187 = vunpack.c.l.b16 %v83
    %v188 = vunpack.c.h.b16 %v83
    %v189 = vunpack.c.l.b16 %v84
    %v190 = vunpack.c.h.b16 %v84
    %v191 = vunpack.c.l.b16 %v85
    %v192 = vunpack.c.h.b16 %v85
    %v193 = vunpack.c.l.b16 %v86
    %v194 = vunpack.c.h.b16 %v86
    %v195 = vunpack.c.l.b16 %v87
    %v196 = vunpack.c.h.b16 %v87
    %v197 = vunpack.c.l.b16 %v88
    %v198 = vunpack.c.h.b16 %v88
    %v199 = vunpack.c.l.b16 %v89
    %v200 = vunpack.c.h.b16 %v89
    %v201 = vunpack.c.l.b16 %v90
    %v202 = vunpack.c.h.b16 %v90
    %v203 = vunpack.c.l.b16 %v91
    %v204 = vunpack.c.h.b16 %v91
    %v205 = vunpack.c.l.b16 %v92
    %v206 = vunpack.c.h.b16 %v92
    %v207 = vunpack.c.l.b16 %v93
    %v208 = vunpack.c.h.b16 %v93
    %v209 = vunpack.c.l.b16 %v94
    %v210 = vunpack.c.h.b16 %v94
    %v211 = vunpack.c.l.b16 %v95
    %v212 = vunpack.c.h.b16 %v95
    %v213 = vunpack.c.l.b16 %v96
    %v214 = vunpack.c.h.b16 %v96
    %v215 = vpack.c.b16 %v153, %v151
    %v216 = vpack.c.b16 %v154, %v152
    %v217 = vpack.c.b16 %v157, %v155
    %v218 = vpack.c.b16 %v158, %v156
    %v219 = vpack.c.b16 %v161, %v159
    %v220 = vpack.c.b16 %v162, %v160
    %v221 = vpack.c.b16 %v165, %v163
    %v222 = vpack.c.b16 %v166, %v164
    %v223 = vpack.c.b16 %v169, %v167
    %v224 = vpack.c.b16 %v170, %v168
    %v225 = vpack.c.b16 %v173, %v171
    %v226 = vpack.c.b16 %v174, %v172
    %v227 = vpack.c.b16 %v177, %v175
    %v228 = vpack.c.b16 %v178, %v176
    %v229 = vpack.c.b16 %v181, %v179
    %v230 = vpack.c.b16 %v182, %v180
    %v231 = vpack.c.b16 %v185, %v183
    %v232 = vpack.c.b16 %v186, %v184
    %v233 = vpack.c.b16 %v189, %v187
    %v234 = vpack.c.b16 %v190, %v188
    %v235 = vpack.c.b16 %v193, %v191
    %v236 = vpack.c.b16 %v194, %v192
    %v237 = vpack.c.b16 %v197, %v195
    %v238 = vpack.c.b16 %v198, %v196
    %v239 = vpack.c.b16 %v201, %v199
    %v240 = vpack.c.b16 %v202, %v200
    %v241 = vpack.c.b16 %v205, %v203
    %v242 = vpack.c.b16 %v206, %v204
    %v243 = vpack.c.b16 %v209, %v207
    %v244 = vpack.c.b16 %v210, %v208
    %v245 = vpack.c.b16 %v213, %v211
    %v246 = vpack.c.b16 %v214, %v212
    %279 = vmatprep.subr.bf16.mxu0 %v216
    %280 = vmatpush1.bf16.msra.mxu0 %v215
    %281 = vmatprep.subr.bf16.mxu0 %v218
    %282 = vmatpush1.bf16.msra.mxu0 %v217
    %283 = vmatprep.subr.bf16.mxu0 %v220
    %284 = vmatpush1.bf16.msra.mxu0 %v219
    %285 = vmatprep.subr.bf16.mxu0 %v222
    %286 = vmatpush1.bf16.msra.mxu0 %v221
    %287 = vmatprep.subr.bf16.mxu0 %v224
    %288 = vmatpush1.bf16.msra.mxu0 %v223
    %289 = vmatprep.subr.bf16.mxu0 %v226
    %290 = vmatpush1.bf16.msra.mxu0 %v225
    %291 = vmatprep.subr.bf16.mxu0 %v228
    %292 = vmatpush1.bf16.msra.mxu0 %v227
    %293 = vmatprep.subr.bf16.mxu0 %v230
    %294 = vmatpush1.bf16.msra.mxu0 %v229
    %295 = vmatprep.subr.bf16.mxu0 %v232
    %296 = vmatpush1.bf16.msra.mxu0 %v231
    %297 = vmatprep.subr.bf16.mxu0 %v234
    %298 = vmatpush1.bf16.msra.mxu0 %v233
    %299 = vmatprep.subr.bf16.mxu0 %v236
    %300 = vmatpush1.bf16.msra.mxu0 %v235
    %301 = vmatprep.subr.bf16.mxu0 %v238
    %302 = vmatpush1.bf16.msra.mxu0 %v237
    %303 = vmatprep.subr.bf16.mxu0 %v240
    %304 = vmatpush1.bf16.msra.mxu0 %v239
    %305 = vmatprep.subr.bf16.mxu0 %v242
    %306 = vmatpush1.bf16.msra.mxu0 %v241
    %307 = vmatprep.subr.bf16.mxu0 %v244
    %308 = vmatpush1.bf16.msra.mxu0 %v243
    %309 = vmatprep.subr.bf16.mxu0 %v246
    %310 = vmatpush1.bf16.msra.mxu0 %v245
    %311 = vmatprep.mubr.bf16.mxu0 %v116
    %312 = vmatmul.mubr.bf16.gmra.mrb[0].mxu0 %v115
    %v313 = vpop.f32.mrb[0].mxu0
    %v314 = vadd.f32 %v102, %v313
    %v315 = vpop.f32.mrb[0].mxu0
    %v316 = vadd.f32 %v106, %v315
    %v317 = vpop.f32.mrb[0].mxu0
    %v318 = vadd.f32 %v102, %v317
    %v319 = vpop.f32.mrb[0].mxu0
    %v320 = vadd.f32 %v106, %v319
    %321 = vdwg.mxu0
    %v322 = vmax.f32 %v314, 0.0
    %v323 = vmax.f32 %v316, 0.0
    %v324 = vmax.f32 %v318, 0.0
    %v325 = vmax.f32 %v320, 0.0
    %v326 = vpack.c.bf16 %v324, %v322
    %v327 = vpack.c.bf16 %v325, %v323
    %v328 = vld [vmem:[#allocation7] sm:$0xf]
    %v329 = vld [vmem:[#allocation7 + $0x4] sm:$0xf]
    %v330 = vld [vmem:[#allocation7 + $0x8] sm:$0xf]
    %v331 = vld [vmem:[#allocation7 + $0xc] sm:$0xf]
    %v332 = vld [vmem:[#allocation7 + $0x10] sm:$0xf]
    %v333 = vld [vmem:[#allocation7 + $0x14] sm:$0xf]
    %v334 = vld [vmem:[#allocation7 + $0x18] sm:$0xf]
    %v335 = vld [vmem:[#allocation7 + $0x1c] sm:$0xf]
    %v336 = vld [vmem:[#allocation7 + $0x20] sm:$0xf]
    %v337 = vld [vmem:[#allocation7 + $0x24] sm:$0xf]
    %v338 = vld [vmem:[#allocation7 + $0x28] sm:$0xf]
    %v339 = vld [vmem:[#allocation7 + $0x2c] sm:$0xf]
    %v340 = vld [vmem:[#allocation7 + $0x30] sm:$0xf]
    %v341 = vld [vmem:[#allocation7 + $0x34] sm:$0xf]
    %v342 = vld [vmem:[#allocation7 + $0x38] sm:$0xf]
    %v343 = vld [vmem:[#allocation7 + $0x3c] sm:$0xf]
    %v344 = vld [vmem:[#allocation7 + $0x40] sm:$0xf]
    %v345 = vld [vmem:[#allocation7 + $0x44] sm:$0xf]
    %v346 = vld [vmem:[#allocation7 + $0x48] sm:$0xf]
    %v347 = vld [vmem:[#allocation7 + $0x4c] sm:$0xf]
    %v348 = vld [vmem:[#allocation7 + $0x50] sm:$0xf]
    %v349 = vld [vmem:[#allocation7 + $0x54] sm:$0xf]
    %v350 = vld [vmem:[#allocation7 + $0x58] sm:$0xf]
    %v351 = vld [vmem:[#allocation7 + $0x5c] sm:$0xf]
    %v352 = vld [vmem:[#allocation7 + $0x60] sm:$0xf]
    %v353 = vld [vmem:[#allocation7 + $0x64] sm:$0xf]
    %v354 = vld [vmem:[#allocation7 + $0x68] sm:$0xf]
    %v355 = vld [vmem:[#allocation7 + $0x6c] sm:$0xf]
    %v356 = vld [vmem:[#allocation7 + $0x70] sm:$0xf]
    %v357 = vld [vmem:[#allocation7 + $0x74] sm:$0xf]
    %v358 = vld [vmem:[#allocation7 + $0x78] sm:$0xf]
    %v359 = vld [vmem:[#allocation7 + $0x7c] sm:$0xf]
    %v360 = vld [vmem:[%s4] sm:$0x1]
    %v362 = vlaneseq
    %v363 = vshrl.u32 %v362, 7
    %v364 = vsub.s32 0, %v363
    %v365 = vrot.slane %v360, %v364
    %v399 = vunpack.c.l.b16 %v328
    %v400 = vunpack.c.l.b16 %v329
    %v401 = vunpack.c.l.b16 %v330
    %v402 = vunpack.c.l.b16 %v331
    %v403 = vunpack.c.l.b16 %v332
    %v404 = vunpack.c.l.b16 %v333
    %v405 = vunpack.c.l.b16 %v334
    %v406 = vunpack.c.l.b16 %v335
    %v407 = vunpack.c.l.b16 %v336
    %v408 = vunpack.c.l.b16 %v337
    %v409 = vunpack.c.l.b16 %v338
    %v410 = vunpack.c.l.b16 %v339
    %v411 = vunpack.c.l.b16 %v340
    %v412 = vunpack.c.l.b16 %v341
    %v413 = vunpack.c.l.b16 %v342
    %v414 = vunpack.c.l.b16 %v343
    %v415 = vunpack.c.l.b16 %v344
    %v416 = vunpack.c.l.b16 %v345
    %v417 = vunpack.c.l.b16 %v346
    %v418 = vunpack.c.l.b16 %v347
    %v419 = vunpack.c.l.b16 %v348
    %v420 = vunpack.c.l.b16 %v349
    %v421 = vunpack.c.l.b16 %v350
    %v422 = vunpack.c.l.b16 %v351
    %v423 = vunpack.c.l.b16 %v352
    %v424 = vunpack.c.l.b16 %v353
    %v425 = vunpack.c.l.b16 %v354
    %v426 = vunpack.c.l.b16 %v355
    %v427 = vunpack.c.l.b16 %v356
    %v428 = vunpack.c.l.b16 %v357
    %v429 = vunpack.c.l.b16 %v358
    %v430 = vunpack.c.l.b16 %v359
    %v431 = vpack.c.b16 %v400, %v399
    %v432 = vpack.c.b16 %v402, %v401
    %v433 = vpack.c.b16 %v404, %v403
    %v434 = vpack.c.b16 %v406, %v405
    %v435 = vpack.c.b16 %v408, %v407
    %v436 = vpack.c.b16 %v410, %v409
    %v437 = vpack.c.b16 %v412, %v411
    %v438 = vpack.c.b16 %v414, %v413
    %v439 = vpack.c.b16 %v416, %v415
    %v440 = vpack.c.b16 %v418, %v417
    %v441 = vpack.c.b16 %v420, %v419
    %v442 = vpack.c.b16 %v422, %v421
    %v443 = vpack.c.b16 %v424, %v423
    %v444 = vpack.c.b16 %v426, %v425
    %v445 = vpack.c.b16 %v428, %v427
    %v446 = vpack.c.b16 %v430, %v429
    %463 = vmatprep.subr.bf16.mxu0 0
    %464 = vmatpush1.bf16.msra.mxu0 %v431
    %465 = vmatprep.subr.bf16.mxu0 0
    %466 = vmatpush1.bf16.msra.mxu0 %v432
    %467 = vmatprep.subr.bf16.mxu0 0
    %468 = vmatpush1.bf16.msra.mxu0 %v433
    %469 = vmatprep.subr.bf16.mxu0 0
    %470 = vmatpush1.bf16.msra.mxu0 %v434
    %471 = vmatprep.subr.bf16.mxu0 0
    %472 = vmatpush1.bf16.msra.mxu0 %v435
    %473 = vmatprep.subr.bf16.mxu0 0
    %474 = vmatpush1.bf16.msra.mxu0 %v436
    %475 = vmatprep.subr.bf16.mxu0 0
    %476 = vmatpush1.bf16.msra.mxu0 %v437
    %477 = vmatprep.subr.bf16.mxu0 0
    %478 = vmatpush1.bf16.msra.mxu0 %v438
    %479 = vmatprep.subr.bf16.mxu0 0
    %480 = vmatpush1.bf16.msra.mxu0 %v439
    %481 = vmatprep.subr.bf16.mxu0 0
    %482 = vmatpush1.bf16.msra.mxu0 %v440
    %483 = vmatprep.subr.bf16.mxu0 0
    %484 = vmatpush1.bf16.msra.mxu0 %v441
    %485 = vmatprep.subr.bf16.mxu0 0
    %486 = vmatpush1.bf16.msra.mxu0 %v442
    %487 = vmatprep.subr.bf16.mxu0 0
    %488 = vmatpush1.bf16.msra.mxu0 %v443
    %489 = vmatprep.subr.bf16.mxu0 0
    %490 = vmatpush1.bf16.msra.mxu0 %v444
    %491 = vmatprep.subr.bf16.mxu0 0
    %492 = vmatpush1.bf16.msra.mxu0 %v445
    %493 = vmatprep.subr.bf16.mxu0 0
    %494 = vmatpush1.bf16.msra.mxu0 %v446
    %495 = vmatprep.mubr.bf16.mxu0 %v327
    %496 = vmatmul.mubr.bf16.gmra.mrb[0].mxu0 %v326
    %v497 = vpop.f32.mrb[0].mxu0
    %v498 = vadd.f32 %v365, %v497
    %v499 = vpop.f32.mrb[0].mxu0
    %v500 = vpop.f32.mrb[0].mxu0
    %v501 = vadd.f32 %v365, %v500
    %v502 = vpop.f32.mrb[0].mxu0
    %503 = vdwg.mxu0
    %504 = vst [vmem:[#allocation8] sm:$0xff] %v498
    %505 = vst [vmem:[#allocation8 + $0x8] sm:$0xff] %v501
    // Predicated region
    $region34: #{tpu_custom_call.1} parent=1 // pred_check
      _
    $region35: #{tpu_custom_call.1} parent=1 // pred_check_branch
      %507 = sbr.rel (0) target = $region37
    $region36: #{tpu_custom_call.1} parent=1 // pred_region
      %s509 = ssub.s32 256, 256
      %510 = vsyncadd [#allocation4], %s509
      %s511 = sshll.u32 [#allocation8], 4
      %s512 = int_to_ptr.vmem [resolvable:$true] %s511
      %517 = dma.vmem_to_hbm [thread:$0]  %s512, 256, %s5, [#allocation4], 128, 128, 8
    $region37: #{tpu_custom_call.1} parent=1 // pred_fallthru
      _
    // Predicated region
    $region38: #{tpu_custom_call.1} parent=1 // pred_check
      _
    $region39: #{tpu_custom_call.1} parent=1 // pred_check_branch
      %519 = sbr.rel (0) target = $region41
    $region40: #{tpu_custom_call.1} parent=1 // pred_region
      %520 = dma.done [#allocation4], 256
    $region41: #{tpu_custom_call.1} parent=1 // pred_fallthru
      _
    %521 = vsyncpa [#allocation3], 1
    %522 = vsyncpa [#allocation6], 1
    %523 = vsyncpa [#allocation4], 1

</llo_original>
